<compile_context>
chip_gen: v6e
topology: v6e:2x2x1
jax: 0.10.0
libtpu: 0.0.40
codegen_flags: <defaults>
</compile_context>

<pallas_src>
import jax
import jax.numpy as jnp
from jax import lax
from jax.experimental import pallas as pl
from jax.experimental.pallas import tpu as pltpu

BN_EPS = 1e-5
IN_FEATURES = 169
H1, H2, H3 = 256, 512, 256


def _round_up(x, m):
    return (x + m - 1) // m * m


def _mlp_kernel(x_ref,
                w1_ref, b1_ref,
                w2_ref, b2_ref,
                w3_ref, b3_ref,
                wo_ref, bo_ref,
                o_ref):
    """Fused per-batch-tile forward: 3 MXU matmuls + ReLU, transposed MXU head."""
    x = x_ref[...].astype(jnp.bfloat16)                               # (TB, 169)

    h = jnp.dot(x, w1_ref[...], preferred_element_type=jnp.float32) + b1_ref[...]
    h = jnp.maximum(h, 0.0)                                           # ReLU (BN1 folded into W2/b2)

    h = jnp.dot(h.astype(jnp.bfloat16), w2_ref[...],
                preferred_element_type=jnp.float32) + b2_ref[...]
    h = jnp.maximum(h, 0.0)                                           # ReLU (BN2 folded into W3/b3)

    h = jnp.dot(h.astype(jnp.bfloat16), w3_ref[...],
                preferred_element_type=jnp.float32) + b3_ref[...]
    h = jnp.maximum(h, 0.0)                                           # ReLU (BN3 folded into Wout/bout)

    # TODO(synk): nn.Dropout(p=0.1) is identity in eval mode; training-mode
    # stochastic masking and training-mode BN batch statistics are not reproduced.

    # Final Linear(256->1), computed transposed: (1,256) x (TB,256)^T -> (1,TB)
    # lane-major, f32 accumulation, stored as one lane-dense block.
    out = lax.dot_general(wo_ref[...], h, (((1,), (1,)), ((), ())),
                          preferred_element_type=jnp.float32)         # (1, TB)
    o_ref[...] = out + bo_ref[...]


def _pick_batch_tile(n):
    nb = _round_up(max(n, 1), 8)
    if nb <= 512:
        return nb          # single tile: block last-dim == full padded dim
    return 512             # multi-tile: multiple of 128 -> lane-dense output blocks


def mlp_forward(x, prepared):
    n, k_in = x.shape
    assert k_in == IN_FEATURES, k_in

    tb = _pick_batch_tile(n)
    n_pad = _round_up(n, tb)
    n_tiles = n_pad // tb

    def const_spec(arr):
        # Constant index_map: weights/biases stay resident in VMEM across steps.
        return pl.BlockSpec(arr.shape, lambda i: (0, 0))

    args = (x,
            prepared["w1"], prepared["b1"],
            prepared["w2"], prepared["b2"],
            prepared["w3"], prepared["b3"],
            prepared["wo_row"], prepared["bo"])

    in_specs = [pl.BlockSpec((tb, IN_FEATURES), lambda i: (i, 0))] + [
        const_spec(a) for a in args[1:]
    ]
    out_spec = pl.BlockSpec((1, tb), lambda i: (0, i))

    weight_bytes = sum(int(a.size) * a.dtype.itemsize for a in args[1:])
    flops = 2 * n_pad * (IN_FEATURES * H1 + H1 * H2 + H2 * H3 + H3)
    bytes_accessed = int(x.size) * x.dtype.itemsize + weight_bytes + n_pad * 4

    out_row = pl.pallas_call(
        _mlp_kernel,
        out_shape=jax.ShapeDtypeStruct((1, n_pad), jnp.float32),
        grid=(n_tiles,),
        in_specs=in_specs,
        out_specs=out_spec,
        compiler_params=pltpu.CompilerParams(
            dimension_semantics=("parallel",),        # batch tiles split across v7x's 2 TCs
            vmem_limit_bytes=32 * 1024 * 1024),       # headroom over v5e's 16 MiB default
        cost_estimate=pl.CostEstimate(
            flops=flops, transcendentals=0, bytes_accessed=bytes_accessed),
    )(*args)

    # Real result is the first n lane-major columns; padded columns are garbage.
    return out_row[:, :n].T                                           # (n, 1)


# --------------------------------------------------------------------------
# Parameter construction (PyTorch-style raw params) and offline preparation
# (BN folding -> next layer, bf16 weight cast).
# --------------------------------------------------------------------------

def _linear_init(key, fan_in, fan_out):
    """PyTorch-style uniform(-1/sqrt(fan_in), 1/sqrt(fan_in)) init."""
    kw, kb = jax.random.split(key)
    bound = 1.0 / jnp.sqrt(jnp.float32(fan_in))
    w = jax.random.uniform(kw, (fan_in, fan_out), jnp.float32, -bound, bound)
    b = jax.random.uniform(kb, (1, fan_out), jnp.float32, -bound, bound)
    return w, b


def _bn_fold(key, num_features):
    """Eval-mode BatchNorm1d as per-feature scale/shift (shape (1, F))."""
    kg, kb, km, kv = jax.random.split(key, 4)
    gamma = 1.0 + 0.1 * jax.random.normal(kg, (1, num_features), jnp.float32)
    beta = 0.1 * jax.random.normal(kb, (1, num_features), jnp.float32)
    run_mean = 0.1 * jax.random.normal(km, (1, num_features), jnp.float32)
    run_var = jnp.abs(1.0 + 0.1 * jax.random.normal(kv, (1, num_features),
                                                    jnp.float32))
    scale = gamma / jnp.sqrt(run_var + BN_EPS)
    shift = beta - run_mean * scale
    return scale, shift


def make_raw_params(key):
    keys = jax.random.split(key, 7)
    w1, b1 = _linear_init(keys[0], 169, 256)
    w2, b2 = _linear_init(keys[1], 256, 512)
    w3, b3 = _linear_init(keys[2], 512, 256)
    wo, bo = _linear_init(keys[3], 256, 1)
    s1, t1 = _bn_fold(keys[4], 256)
    s2, t2 = _bn_fold(keys[5], 512)
    s3, t3 = _bn_fold(keys[6], 256)
    return dict(w1=w1, b1=b1, s1=s1, t1=t1,
                w2=w2, b2=b2, s2=s2, t2=t2,
                w3=w3, b3=b3, s3=s3, t3=t3,
                wo=wo, bo=bo)


def prepare_params(p):
    """Fold BN into the following linear (f32), cast matmul weights to bf16."""
    # (relu(xW1+b1) * s1 + t1) @ W2 + b2  ==  relu(xW1+b1) @ (s1^T * W2) + (t1 @ W2 + b2)
    w2f = p["s1"].T * p["w2"]
    b2f = p["t1"] @ p["w2"] + p["b2"]
    w3f = p["s2"].T * p["w3"]
    b3f = p["t2"] @ p["w3"] + p["b3"]
    wof = p["s3"].T * p["wo"]                 # (256, 1)
    bof = p["t3"] @ p["wo"] + p["bo"]         # (1, 1)

    return dict(
        w1=p["w1"].astype(jnp.bfloat16), b1=p["b1"],
        w2=w2f.astype(jnp.bfloat16), b2=b2f,
        w3=w3f.astype(jnp.bfloat16), b3=b3f,
        wo_row=wof.T,                          # (1, 256) f32 head weights
        bo=bof,                                # (1, 1)   f32
    )


# --------------------------------------------------------------------------
# References
# --------------------------------------------------------------------------

def reference_forward_f32(x, p):
    """Original eval-mode forward, full f32, unfolded BN (ground truth)."""
    h = jnp.maximum(x @ p["w1"] + p["b1"], 0.0) * p["s1"] + p["t1"]
    h = jnp.maximum(h @ p["w2"] + p["b2"], 0.0) * p["s2"] + p["t2"]
    h = jnp.maximum(h @ p["w3"] + p["b3"], 0.0) * p["s3"] + p["t3"]
    return h @ p["wo"] + p["bo"]


def reference_forward_prepared(x, pp):
    """Plain-JAX forward using the exact prepared (folded, bf16) params."""
    xb = x.astype(jnp.bfloat16)
    h = jnp.maximum(jnp.dot(xb, pp["w1"], preferred_element_type=jnp.float32)
                    + pp["b1"], 0.0)
    h = jnp.maximum(jnp.dot(h.astype(jnp.bfloat16), pp["w2"],
                            preferred_element_type=jnp.float32) + pp["b2"], 0.0)
    h = jnp.maximum(jnp.dot(h.astype(jnp.bfloat16), pp["w3"],
                            preferred_element_type=jnp.float32) + pp["b3"], 0.0)
    return h @ pp["wo_row"].T + pp["bo"]


if __name__ == "__main__":
    key = jax.random.PRNGKey(0)
    k_params, k_x = jax.random.split(key)

    raw = make_raw_params(k_params)
    prepared = prepare_params(raw)

    batch = 8
    x = jax.random.normal(k_x, (batch, IN_FEATURES), jnp.float32)

    out = jax.block_until_ready(mlp_forward(x, prepared))
    assert out.shape == (batch, 1), out.shape

    # Apples-to-apples check (same folded/bf16 params, plain JAX).
    ref_bf16 = reference_forward_prepared(x, prepared)
    assert jnp.allclose(out, ref_bf16, atol=2e-3, rtol=2e-3), "mismatch vs prepared ref"

    # Loose check against the original full-f32 eval-mode forward (bf16 rounding).
    ref_f32 = reference_forward_f32(x, raw)
    assert jnp.allclose(out, ref_f32, atol=3e-2, rtol=3e-2), "mismatch vs f32 ref"

    print("KERNEL_OK")
</pallas_src>

<mosaic_0001>
module attributes {stable_mosaic.version = 11 : i64} {
  func.func @_mlp_kernel(%arg0: i32, %arg1: memref<8x169xf32, #tpu.memory_space<vmem>>, %arg2: memref<169x256xbf16, #tpu.memory_space<vmem>>, %arg3: memref<1x256xf32, #tpu.memory_space<vmem>>, %arg4: memref<256x512xbf16, #tpu.memory_space<vmem>>, %arg5: memref<1x512xf32, #tpu.memory_space<vmem>>, %arg6: memref<512x256xbf16, #tpu.memory_space<vmem>>, %arg7: memref<1x256xf32, #tpu.memory_space<vmem>>, %arg8: memref<1x256xf32, #tpu.memory_space<vmem>>, %arg9: memref<1x1xf32, #tpu.memory_space<vmem>>, %arg10: memref<1x8xf32, #tpu.memory_space<vmem>>) attributes {dimension_semantics = [#tpu.dimension_semantics<parallel>], iteration_bounds = array<i64: 1>, scalar_prefetch = 0 : i64, scratch_operands = 0 : i64, tpu.core_type = #tpu.core_type<tc>, window_params = [{transform_indices = @transform_0, window_bounds = array<i64: 8, 169>}, {pipeline_mode = #tpu.pipeline_mode<synchronous>, transform_indices = @transform_1, window_bounds = array<i64: 169, 256>}, {pipeline_mode = #tpu.pipeline_mode<synchronous>, transform_indices = @transform_2, window_bounds = array<i64: 1, 256>}, {pipeline_mode = #tpu.pipeline_mode<synchronous>, transform_indices = @transform_3, window_bounds = array<i64: 256, 512>}, {pipeline_mode = #tpu.pipeline_mode<synchronous>, transform_indices = @transform_4, window_bounds = array<i64: 1, 512>}, {pipeline_mode = #tpu.pipeline_mode<synchronous>, transform_indices = @transform_5, window_bounds = array<i64: 512, 256>}, {pipeline_mode = #tpu.pipeline_mode<synchronous>, transform_indices = @transform_6, window_bounds = array<i64: 1, 256>}, {pipeline_mode = #tpu.pipeline_mode<synchronous>, transform_indices = @transform_7, window_bounds = array<i64: 1, 256>}, {pipeline_mode = #tpu.pipeline_mode<synchronous>, transform_indices = @transform_8, window_bounds = array<i64: 1, 1>}, {transform_indices = @transform_9, window_bounds = array<i64: 1, 8>}]} {
    %c0 = arith.constant 0 : index
    %c0_0 = arith.constant 0 : index
    %0 = vector.load %arg1[%c0, %c0_0] : memref<8x169xf32, #tpu.memory_space<vmem>>, vector<8x169xf32>
    %1 = arith.truncf %0 : vector<8x169xf32> to vector<8x169xbf16>
    %c0_1 = arith.constant 0 : index
    %c0_2 = arith.constant 0 : index
    %2 = vector.load %arg2[%c0_1, %c0_2] : memref<169x256xbf16, #tpu.memory_space<vmem>>, vector<169x256xbf16>
    %cst = arith.constant dense<0.000000e+00> : vector<8x256xf32>
    %3 = tpu.matmul %1, %2, %cst {dimension_numbers = #tpu.dot_dimension_numbers<[1], [0], [0], [1], [0, 0, 1, 1], [], []>} : vector<8x169xbf16>, vector<169x256xbf16>, vector<8x256xf32> -> vector<8x256xf32>
    %c0_3 = arith.constant 0 : index
    %c0_4 = arith.constant 0 : index
    %4 = vector.load %arg3[%c0_3, %c0_4] : memref<1x256xf32, #tpu.memory_space<vmem>>, vector<1x256xf32>
    %5 = vector.broadcast %4 : vector<1x256xf32> to vector<8x256xf32>
    %6 = arith.addf %3, %5 : vector<8x256xf32>
    %cst_5 = arith.constant 0.000000e+00 : f32
    %7 = vector.broadcast %cst_5 : f32 to vector<8x256xf32>
    %8 = arith.maximumf %6, %7 : vector<8x256xf32>
    %9 = arith.truncf %8 : vector<8x256xf32> to vector<8x256xbf16>
    %c0_6 = arith.constant 0 : index
    %c0_7 = arith.constant 0 : index
    %10 = vector.load %arg4[%c0_6, %c0_7] : memref<256x512xbf16, #tpu.memory_space<vmem>>, vector<256x512xbf16>
    %cst_8 = arith.constant dense<0.000000e+00> : vector<8x512xf32>
    %11 = tpu.matmul %9, %10, %cst_8 {dimension_numbers = #tpu.dot_dimension_numbers<[1], [0], [0], [1], [0, 0, 1, 1], [], []>} : vector<8x256xbf16>, vector<256x512xbf16>, vector<8x512xf32> -> vector<8x512xf32>
    %c0_9 = arith.constant 0 : index
    %c0_10 = arith.constant 0 : index
    %12 = vector.load %arg5[%c0_9, %c0_10] : memref<1x512xf32, #tpu.memory_space<vmem>>, vector<1x512xf32>
    %13 = vector.broadcast %12 : vector<1x512xf32> to vector<8x512xf32>
    %14 = arith.addf %11, %13 : vector<8x512xf32>
    %cst_11 = arith.constant 0.000000e+00 : f32
    %15 = vector.broadcast %cst_11 : f32 to vector<8x512xf32>
    %16 = arith.maximumf %14, %15 : vector<8x512xf32>
    %17 = arith.truncf %16 : vector<8x512xf32> to vector<8x512xbf16>
    %c0_12 = arith.constant 0 : index
    %c0_13 = arith.constant 0 : index
    %18 = vector.load %arg6[%c0_12, %c0_13] : memref<512x256xbf16, #tpu.memory_space<vmem>>, vector<512x256xbf16>
    %cst_14 = arith.constant dense<0.000000e+00> : vector<8x256xf32>
    %19 = tpu.matmul %17, %18, %cst_14 {dimension_numbers = #tpu.dot_dimension_numbers<[1], [0], [0], [1], [0, 0, 1, 1], [], []>} : vector<8x512xbf16>, vector<512x256xbf16>, vector<8x256xf32> -> vector<8x256xf32>
    %c0_15 = arith.constant 0 : index
    %c0_16 = arith.constant 0 : index
    %20 = vector.load %arg7[%c0_15, %c0_16] : memref<1x256xf32, #tpu.memory_space<vmem>>, vector<1x256xf32>
    %21 = vector.broadcast %20 : vector<1x256xf32> to vector<8x256xf32>
    %22 = arith.addf %19, %21 : vector<8x256xf32>
    %cst_17 = arith.constant 0.000000e+00 : f32
    %23 = vector.broadcast %cst_17 : f32 to vector<8x256xf32>
    %24 = arith.maximumf %22, %23 : vector<8x256xf32>
    %c0_18 = arith.constant 0 : index
    %c0_19 = arith.constant 0 : index
    %25 = vector.load %arg8[%c0_18, %c0_19] : memref<1x256xf32, #tpu.memory_space<vmem>>, vector<1x256xf32>
    %cst_20 = arith.constant dense<0.000000e+00> : vector<1x8xf32>
    %26 = tpu.matmul %25, %24, %cst_20 {dimension_numbers = #tpu.dot_dimension_numbers<[1], [1], [0], [0], [0, 0, 1, 0], [], []>} : vector<1x256xf32>, vector<8x256xf32>, vector<1x8xf32> -> vector<1x8xf32>
    %c0_21 = arith.constant 0 : index
    %c0_22 = arith.constant 0 : index
    %27 = vector.load %arg9[%c0_21, %c0_22] : memref<1x1xf32, #tpu.memory_space<vmem>>, vector<1x1xf32>
    %28 = vector.broadcast %27 : vector<1x1xf32> to vector<1x8xf32>
    %29 = arith.addf %26, %28 : vector<1x8xf32>
    %c0_23 = arith.constant 0 : index
    %c0_24 = arith.constant 0 : index
    %30 = vector.load %arg10[%c0_23, %c0_24] : memref<1x8xf32, #tpu.memory_space<vmem>>, vector<1x8xf32>
    tpu.vector_store %arg10[%c0_23, %c0_24], %29 {strides = array<i32>} : memref<1x8xf32, #tpu.memory_space<vmem>>, vector<1x8xf32>,
    return
  }
  func.func @transform_0(%arg0: i32) -> (i32, i32) {
    %c0_i32 = arith.constant 0 : i32
    %c0_i32_0 = arith.constant 0 : i32
    return %arg0, %c0_i32 : i32, i32
  }
  func.func @transform_1(%arg0: i32) -> (i32, i32) {
    %c0_i32 = arith.constant 0 : i32
    %c0_i32_0 = arith.constant 0 : i32
    %c0_i32_1 = arith.constant 0 : i32
    return %c0_i32, %c0_i32_0 : i32, i32
  }
  func.func @transform_2(%arg0: i32) -> (i32, i32) {
    %c0_i32 = arith.constant 0 : i32
    %c0_i32_0 = arith.constant 0 : i32
    %c0_i32_1 = arith.constant 0 : i32
    return %c0_i32, %c0_i32_0 : i32, i32
  }
  func.func @transform_3(%arg0: i32) -> (i32, i32) {
    %c0_i32 = arith.constant 0 : i32
    %c0_i32_0 = arith.constant 0 : i32
    %c0_i32_1 = arith.constant 0 : i32
    return %c0_i32, %c0_i32_0 : i32, i32
  }
  func.func @transform_4(%arg0: i32) -> (i32, i32) {
    %c0_i32 = arith.constant 0 : i32
    %c0_i32_0 = arith.constant 0 : i32
    %c0_i32_1 = arith.constant 0 : i32
    return %c0_i32, %c0_i32_0 : i32, i32
  }
  func.func @transform_5(%arg0: i32) -> (i32, i32) {
    %c0_i32 = arith.constant 0 : i32
    %c0_i32_0 = arith.constant 0 : i32
    %c0_i32_1 = arith.constant 0 : i32
    return %c0_i32, %c0_i32_0 : i32, i32
  }
  func.func @transform_6(%arg0: i32) -> (i32, i32) {
    %c0_i32 = arith.constant 0 : i32
    %c0_i32_0 = arith.constant 0 : i32
    %c0_i32_1 = arith.constant 0 : i32
    return %c0_i32, %c0_i32_0 : i32, i32
  }
  func.func @transform_7(%arg0: i32) -> (i32, i32) {
    %c0_i32 = arith.constant 0 : i32
    %c0_i32_0 = arith.constant 0 : i32
    %c0_i32_1 = arith.constant 0 : i32
    return %c0_i32, %c0_i32_0 : i32, i32
  }
  func.func @transform_8(%arg0: i32) -> (i32, i32) {
    %c0_i32 = arith.constant 0 : i32
    %c0_i32_0 = arith.constant 0 : i32
    %c0_i32_1 = arith.constant 0 : i32
    return %c0_i32, %c0_i32_0 : i32, i32
  }
  func.func @transform_9(%arg0: i32) -> (i32, i32) {
    %c0_i32 = arith.constant 0 : i32
    %c0_i32_0 = arith.constant 0 : i32
    return %c0_i32, %arg0 : i32, i32
  }
}

</mosaic_0001>

<llo_original>
// kernel: tpu_custom_call.1
$region0: #{tpu_custom_call.1}
  #allocation0 [shape = 'u32[]', space=smem, size = 0x4, offset = 0x4, fixed_abs, tag = 'smem constant byte address 0x4 - core index']
  #allocation1 [shape = 'u32[144,128]{1,0:T(1,128)}', space=vmem, size = 0x12000, scoped, tag = 'internal scratch']
  #allocation2 [shape = 'f32[1,1]{1,0:T(1,128)S(1)}', space=vmem, size = 0x200, scoped, tag = 'scoped memory for tpu_custom_call.1']
  %s0 = inlined_call_operand.hbm [shape: f32[8,169], index: 0, kind: input, shape index: {}]
  %s1 = inlined_call_operand.hbm [shape: bf16[169,256], index: 1, kind: input, shape index: {}]
  %s2 = inlined_call_operand.vmem [shape: f32[1,256], index: 2, kind: input, shape index: {}]
  %s3 = inlined_call_operand.hbm [shape: bf16[256,512], index: 3, kind: input, shape index: {}]
  %s4 = inlined_call_operand.vmem [shape: f32[1,512], index: 4, kind: input, shape index: {}]
  %s5 = inlined_call_operand.hbm [shape: bf16[512,256], index: 5, kind: input, shape index: {}]
  %s6 = inlined_call_operand.vmem [shape: f32[1,256], index: 6, kind: input, shape index: {}]
  %s7 = inlined_call_operand.vmem [shape: f32[1,256], index: 7, kind: input, shape index: {}]
  %s8 = inlined_call_operand.<no memory space> [shape: f32[1,1], index: 8, kind: input, shape index: {}]
  %s9 = inlined_call_operand.hbm [shape: f32[1,8], index: 9, kind: output, shape index: {}]
  %s10 = sld [smem:[#allocation0]]
  $region62: #{tpu_custom_call.1} parent=0
    _
  %s12 = ssub.s32 1, %s10
  %s13 = scalar_select 0, %s12, %s10
  %v14 = vstv %s8
  %15 = vst [vmem:[#allocation2] sm:$0x1] %v14
  $region1: #{tpu_custom_call.1} parent=0
    #allocation3 [shape = 'u8[8192]{0}', space=vmem, size = 0x2000, scoped, tag = 'input window, operand 0, single buffered']
    #allocation4 [shape = 's32[1]{0}', space=sflag, size = 0x4, scoped, tag = 'scoped memory for tpu_custom_call.1']
    #allocation5 [shape = 's32[1]{0}', space=sflag, size = 0x4, scoped, tag = 'scoped memory for tpu_custom_call.1']
    #allocation6 [shape = 'u8[90112]{0}', space=vmem, size = 0x16000, scoped, tag = 'input window, operand 1, single buffered']
    #allocation7 [shape = 's32[1]{0}', space=sflag, size = 0x4, scoped, tag = 'scoped memory for tpu_custom_call.1']
    #allocation8 [shape = 'u8[262144]{0}', space=vmem, size = 0x40000, scoped, tag = 'input window, operand 3, single buffered']
    #allocation9 [shape = 'u8[262144]{0}', space=vmem, size = 0x40000, scoped, tag = 'input window, operand 5, single buffered']
    #allocation10 [shape = 's32[1]{0}', space=sflag, size = 0x4, scoped, tag = 'scoped memory for tpu_custom_call.1']
    #allocation11 [shape = 'u8[512]{0}', space=vmem, size = 0x400, scoped, tag = 'output window, operand 0, single buffered']
    %16 = vsyncpa [#allocation4], 0
    %17 = vsyncpa [#allocation7], 0
    %18 = vsyncpa [#allocation10], 0
    %19 = vsyncpa [#allocation5], 0
    // Predicated region
    $region2: #{tpu_custom_call.1} parent=1 // pred_check
      _
    $region3: #{tpu_custom_call.1} parent=1 // pred_check_branch
      %21 = sbr.rel (0) target = $region5
    $region4: #{tpu_custom_call.1} parent=1 // pred_region
      %s23 = ssub.s32 256, 256
      %24 = vsyncadd [#allocation4], %s23
      %s26 = sshll.u32 [#allocation3], 4
      %s27 = int_to_ptr.vmem [resolvable:$true] %s26
      %29 = dma.hbm_to_vmem [thread:$0]  %s0, 256, %s27, [#allocation4]
    $region5: #{tpu_custom_call.1} parent=1 // pred_fallthru
      _
    // Predicated region
    $region6: #{tpu_custom_call.1} parent=1 // pred_check
      _
    $region7: #{tpu_custom_call.1} parent=1 // pred_check_branch
      %31 = sbr.rel (0) target = $region9
    $region8: #{tpu_custom_call.1} parent=1 // pred_region
      %s33 = ssub.s32 2816, 2816
      %34 = vsyncadd [#allocation7], %s33
      %s35 = sshll.u32 [#allocation6], 4
      %s36 = int_to_ptr.vmem [resolvable:$true] %s35
      %41 = dma.hbm_to_vmem [thread:$0]  %s1, 2816, %s36, [#allocation7], 128, 128, 8
    $region9: #{tpu_custom_call.1} parent=1 // pred_fallthru
      _
    // Predicated region
    $region10: #{tpu_custom_call.1} parent=1 // pred_check
      _
    $region11: #{tpu_custom_call.1} parent=1 // pred_check_branch
      %43 = sbr.rel (0) target = $region13
    $region12: #{tpu_custom_call.1} parent=1 // pred_region
      _
    $region13: #{tpu_custom_call.1} parent=1 // pred_fallthru
      _
    // Predicated region
    $region14: #{tpu_custom_call.1} parent=1 // pred_check
      _
    $region15: #{tpu_custom_call.1} parent=1 // pred_check_branch
      %45 = sbr.rel (0) target = $region17
    $region16: #{tpu_custom_call.1} parent=1 // pred_region
      %s47 = ssub.s32 8192, 8192
      %48 = vsyncadd [#allocation7], %s47
      %s49 = sshll.u32 [#allocation8], 4
      %s50 = int_to_ptr.vmem [resolvable:$true] %s49
      %55 = dma.hbm_to_vmem [thread:$0]  %s3, 8192, %s50, [#allocation7], 256, 256, 16
    $region17: #{tpu_custom_call.1} parent=1 // pred_fallthru
      _
    // Predicated region
    $region18: #{tpu_custom_call.1} parent=1 // pred_check
      _
    $region19: #{tpu_custom_call.1} parent=1 // pred_check_branch
      %57 = sbr.rel (0) target = $region21
    $region20: #{tpu_custom_call.1} parent=1 // pred_region
      _
    $region21: #{tpu_custom_call.1} parent=1 // pred_fallthru
      _
    // Predicated region
    $region22: #{tpu_custom_call.1} parent=1 // pred_check
      _
    $region23: #{tpu_custom_call.1} parent=1 // pred_check_branch
      %59 = sbr.rel (0) target = $region25
    $region24: #{tpu_custom_call.1} parent=1 // pred_region
      %s61 = ssub.s32 8192, 8192
      %62 = vsyncadd [#allocation10], %s61
      %s63 = sshll.u32 [#allocation9], 4
      %s64 = int_to_ptr.vmem [resolvable:$true] %s63
      %69 = dma.hbm_to_vmem [thread:$0]  %s5, 8192, %s64, [#allocation10], 128, 128, 8
    $region25: #{tpu_custom_call.1} parent=1 // pred_fallthru
      _
    // Predicated region
    $region26: #{tpu_custom_call.1} parent=1 // pred_check
      _
    $region27: #{tpu_custom_call.1} parent=1 // pred_check_branch
      %71 = sbr.rel (0) target = $region29
    $region28: #{tpu_custom_call.1} parent=1 // pred_region
      _
    $region29: #{tpu_custom_call.1} parent=1 // pred_fallthru
      _
    // Predicated region
    $region30: #{tpu_custom_call.1} parent=1 // pred_check
      _
    $region31: #{tpu_custom_call.1} parent=1 // pred_check_branch
      %73 = sbr.rel (0) target = $region33
    $region32: #{tpu_custom_call.1} parent=1 // pred_region
      _
    $region33: #{tpu_custom_call.1} parent=1 // pred_fallthru
      _
    // Predicated region
    $region34: #{tpu_custom_call.1} parent=1 // pred_check
      _
    $region35: #{tpu_custom_call.1} parent=1 // pred_check_branch
      %75 = sbr.rel (0) target = $region37
    $region36: #{tpu_custom_call.1} parent=1 // pred_region
      _
    $region37: #{tpu_custom_call.1} parent=1 // pred_fallthru
      _
    // Predicated region
    $region38: #{tpu_custom_call.1} parent=1 // pred_check
      _
    $region39: #{tpu_custom_call.1} parent=1 // pred_check_branch
      %77 = sbr.rel (0) target = $region41
    $region40: #{tpu_custom_call.1} parent=1 // pred_region
      %78 = dma.done [#allocation4], 256
    $region41: #{tpu_custom_call.1} parent=1 // pred_fallthru
      _
    // Predicated region
    $region42: #{tpu_custom_call.1} parent=1 // pred_check
      _
    $region43: #{tpu_custom_call.1} parent=1 // pred_check_branch
      %80 = sbr.rel (0) target = $region45
    $region44: #{tpu_custom_call.1} parent=1 // pred_region
      %81 = dma.done [#allocation7], 2816
    $region45: #{tpu_custom_call.1} parent=1 // pred_fallthru
      _
    // Predicated region
    $region46: #{tpu_custom_call.1} parent=1 // pred_check
      _
    $region47: #{tpu_custom_call.1} parent=1 // pred_check_branch
      %83 = sbr.rel (0) target = $region49
    $region48: #{tpu_custom_call.1} parent=1 // pred_region
      %84 = dma.done [#allocation7], 8192
    $region49: #{tpu_custom_call.1} parent=1 // pred_fallthru
      _
    // Predicated region
    $region50: #{tpu_custom_call.1} parent=1 // pred_check
      _
    $region51: #{tpu_custom_call.1} parent=1 // pred_check_branch
      %86 = sbr.rel (0) target = $region53
    $region52: #{tpu_custom_call.1} parent=1 // pred_region
      %87 = dma.done [#allocation10], 8192
    $region53: #{tpu_custom_call.1} parent=1 // pred_fallthru
      _
    %v89 = vld [vmem:[#allocation3] sm:$0xff]
    %v90 = vld [vmem:[#allocation3 + $0x8] sm:$0xff]
    %v91 = vpack.c.bf16 %v89, %v89
    %v92 = vpack.c.bf16 %v90, %v90
    %v93 = vld [vmem:[#allocation6] sm:$0xff]
    %v94 = vld [vmem:[#allocation6 + $0x8] sm:$0xff]
    %v95 = vld [vmem:[#allocation6 + $0x10] sm:$0xff]
    %v96 = vld [vmem:[#allocation6 + $0x18] sm:$0xff]
    %v97 = vld [vmem:[#allocation6 + $0x20] sm:$0xff]
    %v98 = vld [vmem:[#allocation6 + $0x28] sm:$0xff]
    %v99 = vld [vmem:[#allocation6 + $0x30] sm:$0xff]
    %v100 = vld [vmem:[#allocation6 + $0x38] sm:$0xff]
    %v101 = vld [vmem:[#allocation6 + $0x40] sm:$0xff]
    %v102 = vld [vmem:[#allocation6 + $0x48] sm:$0xff]
    %v103 = vld [vmem:[#allocation6 + $0x50] sm:$0xff]
    %v104 = vld [vmem:[#allocation6 + $0x58] sm:$0xff]
    %v105 = vld [vmem:[#allocation6 + $0x60] sm:$0xff]
    %v106 = vld [vmem:[#allocation6 + $0x68] sm:$0xff]
    %v107 = vld [vmem:[#allocation6 + $0x70] sm:$0xff]
    %v108 = vld [vmem:[#allocation6 + $0x78] sm:$0xff]
    %v109 = vld [vmem:[#allocation6 + $0x80] sm:$0xff]
    %v110 = vld [vmem:[#allocation6 + $0x88] sm:$0xff]
    %v111 = vld [vmem:[#allocation6 + $0x90] sm:$0xff]
    %v112 = vld [vmem:[#allocation6 + $0x98] sm:$0xff]
    %v113 = vld [vmem:[#allocation6 + $0xa0] sm:$0xff]
    %v114 = vld [vmem:[#allocation6 + $0xa8] sm:$0x11]
    %v115 = vld [vmem:[%s2] sm:$0x3]
    %v117 = vlaneseq
    %v118 = vshrl.u32 %v117, 7
    %v119 = vsub.s32 0, %v118
    %v120 = vrot.slane %v115, %v119
    %v121 = vlaneseq
    %v122 = vshrl.u32 %v121, 7
    %v123 = vsub.s32 1, %v122
    %v124 = vrot.slane %v115, %v123
    %v149 = vunpack.c.l.b16 %v93
    %v150 = vunpack.c.h.b16 %v93
    %v151 = vunpack.c.l.b16 %v94
    %v152 = vunpack.c.h.b16 %v94
    %v153 = vunpack.c.l.b16 %v95
    %v154 = vunpack.c.h.b16 %v95
    %v155 = vunpack.c.l.b16 %v96
    %v156 = vunpack.c.h.b16 %v96
    %v157 = vunpack.c.l.b16 %v97
    %v158 = vunpack.c.h.b16 %v97
    %v159 = vunpack.c.l.b16 %v98
    %v160 = vunpack.c.h.b16 %v98
    %v161 = vunpack.c.l.b16 %v99
    %v162 = vunpack.c.h.b16 %v99
    %v163 = vunpack.c.l.b16 %v100
    %v164 = vunpack.c.h.b16 %v100
    %v165 = vunpack.c.l.b16 %v101
    %v166 = vunpack.c.h.b16 %v101
    %v167 = vunpack.c.l.b16 %v102
    %v168 = vunpack.c.h.b16 %v102
    %v169 = vunpack.c.l.b16 %v103
    %v170 = vunpack.c.h.b16 %v103
    %v171 = vunpack.c.l.b16 %v104
    %v172 = vunpack.c.h.b16 %v104
    %v173 = vunpack.c.l.b16 %v105
    %v174 = vunpack.c.h.b16 %v105
    %v175 = vunpack.c.l.b16 %v106
    %v176 = vunpack.c.h.b16 %v106
    %v177 = vunpack.c.l.b16 %v107
    %v178 = vunpack.c.h.b16 %v107
    %v179 = vunpack.c.l.b16 %v108
    %v180 = vunpack.c.h.b16 %v108
    %v181 = vunpack.c.l.b16 %v109
    %v182 = vunpack.c.h.b16 %v109
    %v183 = vunpack.c.l.b16 %v110
    %v184 = vunpack.c.h.b16 %v110
    %v185 = vunpack.c.l.b16 %v111
    %v186 = vunpack.c.h.b16 %v111
    %v187 = vunpack.c.l.b16 %v112
    %v188 = vunpack.c.h.b16 %v112
    %v189 = vunpack.c.l.b16 %v113
    %v190 = vunpack.c.h.b16 %v113
    %v191 = vunpack.c.l.b16 %v114
    %v192 = vunpack.c.h.b16 %v114
    %v193 = vpack.c.b16 %v151, %v149
    %v194 = vpack.c.b16 %v152, %v150
    %v195 = vpack.c.b16 %v155, %v153
    %v196 = vpack.c.b16 %v156, %v154
    %v197 = vpack.c.b16 %v159, %v157
    %v198 = vpack.c.b16 %v160, %v158
    %v199 = vpack.c.b16 %v163, %v161
    %v200 = vpack.c.b16 %v164, %v162
    %v201 = vpack.c.b16 %v167, %v165
    %v202 = vpack.c.b16 %v168, %v166
    %v203 = vpack.c.b16 %v171, %v169
    %v204 = vpack.c.b16 %v172, %v170
    %v205 = vpack.c.b16 %v175, %v173
    %v206 = vpack.c.b16 %v176, %v174
    %v207 = vpack.c.b16 %v179, %v177
    %v208 = vpack.c.b16 %v180, %v178
    %v209 = vpack.c.b16 %v183, %v181
    %v210 = vpack.c.b16 %v184, %v182
    %v211 = vpack.c.b16 %v187, %v185
    %v212 = vpack.c.b16 %v188, %v186
    %v213 = vpack.c.b16 %v191, %v189
    %v214 = vpack.c.b16 %v192, %v190
    %vm235 = vcmask 334848
    %v237 = vsel %vm235, %v92, 0
    %vm239 = vcmask 1043456
    %vm240 = vcmask 1044480
    %v241 = vsel %vm239, 4294967295, 65535
    %v242 = vsel %vm240, %v241, 0
    %v244 = vand.u32 %v213, %v242
    %v247 = vand.u32 %v214, %v242
    %249 = vmatprep.subr.bf16.mxu0 %v208
    %250 = vmatpush1.bf16.msra.mxu0 %v207
    %251 = vmatprep.subr.bf16.mxu0 %v206
    %252 = vmatpush1.bf16.msra.mxu0 %v205
    %253 = vmatprep.subr.bf16.mxu0 %v204
    %254 = vmatpush1.bf16.msra.mxu0 %v203
    %255 = vmatprep.subr.bf16.mxu0 %v202
    %256 = vmatpush1.bf16.msra.mxu0 %v201
    %257 = vmatprep.subr.bf16.mxu0 %v200
    %258 = vmatpush1.bf16.msra.mxu0 %v199
    %259 = vmatprep.subr.bf16.mxu0 %v198
    %260 = vmatpush1.bf16.msra.mxu0 %v197
    %261 = vmatprep.subr.bf16.mxu0 %v196
    %262 = vmatpush1.bf16.msra.mxu0 %v195
    %263 = vmatprep.subr.bf16.mxu0 %v194
    %264 = vmatpush1.bf16.msra.mxu0 %v193
    %265 = vmatprep.subr.bf16.mxu0 0
    %266 = vmatpush2.bf16.msra.mxu0 0
    %267 = vmatprep.subr.bf16.mxu0 0
    %268 = vmatpush2.bf16.msra.mxu0 0
    %269 = vmatprep.subr.bf16.mxu0 0
    %270 = vmatpush2.bf16.msra.mxu0 0
    %271 = vmatprep.subr.bf16.mxu0 0
    %272 = vmatpush2.bf16.msra.mxu0 0
    %273 = vmatprep.subr.bf16.mxu0 0
    %274 = vmatpush2.bf16.msra.mxu0 0
    %275 = vmatprep.subr.bf16.mxu0 %v247
    %276 = vmatpush2.bf16.msra.mxu0 %v244
    %277 = vmatprep.subr.bf16.mxu0 %v212
    %278 = vmatpush2.bf16.msra.mxu0 %v211
    %279 = vmatprep.subr.bf16.mxu0 %v210
    %280 = vmatpush2.bf16.msra.mxu0 %v209
    %281 = vmatprep.mubr.bf16.mxu0 %v237
    %282 = vmatmul.mubr.bf16.gmra.mxu0 %v91
    %v283 = vpop.f32.mrf.mxu0
    %v284 = vadd.f32 %v120, %v283
    %v285 = vpop.f32.mrf.mxu0
    %v286 = vadd.f32 %v124, %v285
    %v287 = vpop.f32.mrf.mxu0
    %v288 = vpop.f32.mrf.mxu0
    %289 = vdwg.mxu0
    %v290 = vmax.f32 %v284, 0.0
    %v291 = vmax.f32 %v286, 0.0
    %v292 = vpack.c.bf16 %v290, %v290
    %v293 = vpack.c.bf16 %v291, %v291
    %v294 = vld [vmem:[#allocation8] sm:$0xff]
    %v295 = vld [vmem:[#allocation8 + $0x8] sm:$0xff]
    %v296 = vld [vmem:[#allocation8 + $0x10] sm:$0xff]
    %v297 = vld [vmem:[#allocation8 + $0x18] sm:$0xff]
    %v298 = vld [vmem:[#allocation8 + $0x20] sm:$0xff]
    %v299 = vld [vmem:[#allocation8 + $0x28] sm:$0xff]
    %v300 = vld [vmem:[#allocation8 + $0x30] sm:$0xff]
    %v301 = vld [vmem:[#allocation8 + $0x38] sm:$0xff]
    %v302 = vld [vmem:[#allocation8 + $0x40] sm:$0xff]
    %v303 = vld [vmem:[#allocation8 + $0x48] sm:$0xff]
    %v304 = vld [vmem:[#allocation8 + $0x50] sm:$0xff]
    %v305 = vld [vmem:[#allocation8 + $0x58] sm:$0xff]
    %v306 = vld [vmem:[#allocation8 + $0x60] sm:$0xff]
    %v307 = vld [vmem:[#allocation8 + $0x68] sm:$0xff]
    %v308 = vld [vmem:[#allocation8 + $0x70] sm:$0xff]
    %v309 = vld [vmem:[#allocation8 + $0x78] sm:$0xff]
    %v310 = vld [vmem:[#allocation8 + $0x80] sm:$0xff]
    %v311 = vld [vmem:[#allocation8 + $0x88] sm:$0xff]
    %v312 = vld [vmem:[#allocation8 + $0x90] sm:$0xff]
    %v313 = vld [vmem:[#allocation8 + $0x98] sm:$0xff]
    %v314 = vld [vmem:[#allocation8 + $0xa0] sm:$0xff]
    %v315 = vld [vmem:[#allocation8 + $0xa8] sm:$0xff]
    %v316 = vld [vmem:[#allocation8 + $0xb0] sm:$0xff]
    %v317 = vld [vmem:[#allocation8 + $0xb8] sm:$0xff]
    %v318 = vld [vmem:[#allocation8 + $0xc0] sm:$0xff]
    %v319 = vld [vmem:[#allocation8 + $0xc8] sm:$0xff]
    %v320 = vld [vmem:[#allocation8 + $0xd0] sm:$0xff]
    %v321 = vld [vmem:[#allocation8 + $0xd8] sm:$0xff]
    %v322 = vld [vmem:[#allocation8 + $0xe0] sm:$0xff]
    %v323 = vld [vmem:[#allocation8 + $0xe8] sm:$0xff]
    %v324 = vld [vmem:[#allocation8 + $0xf0] sm:$0xff]
    %v325 = vld [vmem:[#allocation8 + $0xf8] sm:$0xff]
    %v326 = vld [vmem:[#allocation8 + $0x100] sm:$0xff]
    %v327 = vld [vmem:[#allocation8 + $0x108] sm:$0xff]
    %v328 = vld [vmem:[#allocation8 + $0x110] sm:$0xff]
    %v329 = vld [vmem:[#allocation8 + $0x118] sm:$0xff]
    %v330 = vld [vmem:[#allocation8 + $0x120] sm:$0xff]
    %v331 = vld [vmem:[#allocation8 + $0x128] sm:$0xff]
    %v332 = vld [vmem:[#allocation8 + $0x130] sm:$0xff]
    %v333 = vld [vmem:[#allocation8 + $0x138] sm:$0xff]
    %v334 = vld [vmem:[#allocation8 + $0x140] sm:$0xff]
    %v335 = vld [vmem:[#allocation8 + $0x148] sm:$0xff]
    %v336 = vld [vmem:[#allocation8 + $0x150] sm:$0xff]
    %v337 = vld [vmem:[#allocation8 + $0x158] sm:$0xff]
    %v338 = vld [vmem:[#allocation8 + $0x160] sm:$0xff]
    %v339 = vld [vmem:[#allocation8 + $0x168] sm:$0xff]
    %v340 = vld [vmem:[#allocation8 + $0x170] sm:$0xff]
    %v341 = vld [vmem:[#allocation8 + $0x178] sm:$0xff]
    %v342 = vld [vmem:[#allocation8 + $0x180] sm:$0xff]
    %v343 = vld [vmem:[#allocation8 + $0x188] sm:$0xff]
    %v344 = vld [vmem:[#allocation8 + $0x190] sm:$0xff]
    %v345 = vld [vmem:[#allocation8 + $0x198] sm:$0xff]
    %v346 = vld [vmem:[#allocation8 + $0x1a0] sm:$0xff]
    %v347 = vld [vmem:[#allocation8 + $0x1a8] sm:$0xff]
    %v348 = vld [vmem:[#allocation8 + $0x1b0] sm:$0xff]
    %v349 = vld [vmem:[#allocation8 + $0x1b8] sm:$0xff]
    %v350 = vld [vmem:[#allocation8 + $0x1c0] sm:$0xff]
    %v351 = vld [vmem:[#allocation8 + $0x1c8] sm:$0xff]
    %v352 = vld [vmem:[#allocation8 + $0x1d0] sm:$0xff]
    %v353 = vld [vmem:[#allocation8 + $0x1d8] sm:$0xff]
    %v354 = vld [vmem:[#allocation8 + $0x1e0] sm:$0xff]
    %v355 = vld [vmem:[#allocation8 + $0x1e8] sm:$0xff]
    %v356 = vld [vmem:[#allocation8 + $0x1f0] sm:$0xff]
    %v357 = vld [vmem:[#allocation8 + $0x1f8] sm:$0xff]
    %v358 = vld [vmem:[%s4] sm:$0xf]
    %v360 = vlaneseq
    %v361 = vshrl.u32 %v360, 7
    %v362 = vsub.s32 0, %v361
    %v363 = vrot.slane %v358, %v362
    %v364 = vlaneseq
    %v365 = vshrl.u32 %v364, 7
    %v366 = vsub.s32 1, %v365
    %v367 = vrot.slane %v358, %v366
    %v368 = vlaneseq
    %v369 = vshrl.u32 %v368, 7
    %v370 = vsub.s32 2, %v369
    %v371 = vrot.slane %v358, %v370
    %v372 = vlaneseq
    %v373 = vshrl.u32 %v372, 7
    %v374 = vsub.s32 3, %v373
    %v375 = vrot.slane %v358, %v374
    %v444 = vunpack.c.l.b16 %v294
    %v445 = vunpack.c.h.b16 %v294
    %v446 = vunpack.c.l.b16 %v295
    %v447 = vunpack.c.h.b16 %v295
    %v448 = vunpack.c.l.b16 %v296
    %v449 = vunpack.c.h.b16 %v296
    %v450 = vunpack.c.l.b16 %v297
    %v451 = vunpack.c.h.b16 %v297
    %v452 = vunpack.c.l.b16 %v298
    %v453 = vunpack.c.h.b16 %v298
    %v454 = vunpack.c.l.b16 %v299
    %v455 = vunpack.c.h.b16 %v299
    %v456 = vunpack.c.l.b16 %v300
    %v457 = vunpack.c.h.b16 %v300
    %v458 = vunpack.c.l.b16 %v301
    %v459 = vunpack.c.h.b16 %v301
    %v460 = vunpack.c.l.b16 %v302
    %v461 = vunpack.c.h.b16 %v302
    %v462 = vunpack.c.l.b16 %v303
    %v463 = vunpack.c.h.b16 %v303
    %v464 = vunpack.c.l.b16 %v304
    %v465 = vunpack.c.h.b16 %v304
    %v466 = vunpack.c.l.b16 %v305
    %v467 = vunpack.c.h.b16 %v305
    %v468 = vunpack.c.l.b16 %v306
    %v469 = vunpack.c.h.b16 %v306
    %v470 = vunpack.c.l.b16 %v307
    %v471 = vunpack.c.h.b16 %v307
    %v472 = vunpack.c.l.b16 %v308
    %v473 = vunpack.c.h.b16 %v308
    %v474 = vunpack.c.l.b16 %v309
    %v475 = vunpack.c.h.b16 %v309
    %v476 = vunpack.c.l.b16 %v310
    %v477 = vunpack.c.h.b16 %v310
    %v478 = vunpack.c.l.b16 %v311
    %v479 = vunpack.c.h.b16 %v311
    %v480 = vunpack.c.l.b16 %v312
    %v481 = vunpack.c.h.b16 %v312
    %v482 = vunpack.c.l.b16 %v313
    %v483 = vunpack.c.h.b16 %v313
    %v484 = vunpack.c.l.b16 %v314
    %v485 = vunpack.c.h.b16 %v314
    %v486 = vunpack.c.l.b16 %v315
    %v487 = vunpack.c.h.b16 %v315
    %v488 = vunpack.c.l.b16 %v316
    %v489 = vunpack.c.h.b16 %v316
    %v490 = vunpack.c.l.b16 %v317
    %v491 = vunpack.c.h.b16 %v317
    %v492 = vunpack.c.l.b16 %v318
    %v493 = vunpack.c.h.b16 %v318
    %v494 = vunpack.c.l.b16 %v319
    %v495 = vunpack.c.h.b16 %v319
    %v496 = vunpack.c.l.b16 %v320
    %v497 = vunpack.c.h.b16 %v320
    %v498 = vunpack.c.l.b16 %v321
    %v499 = vunpack.c.h.b16 %v321
    %v500 = vunpack.c.l.b16 %v322
    %v501 = vunpack.c.h.b16 %v322
    %v502 = vunpack.c.l.b16 %v323
    %v503 = vunpack.c.h.b16 %v323
    %v504 = vunpack.c.l.b16 %v324
    %v505 = vunpack.c.h.b16 %v324
    %v506 = vunpack.c.l.b16 %v325
    %v507 = vunpack.c.h.b16 %v325
    %v508 = vunpack.c.l.b16 %v326
    %v509 = vunpack.c.h.b16 %v326
    %v510 = vunpack.c.l.b16 %v327
    %v511 = vunpack.c.h.b16 %v327
    %v512 = vunpack.c.l.b16 %v328
    %v513 = vunpack.c.h.b16 %v328
    %v514 = vunpack.c.l.b16 %v329
    %v515 = vunpack.c.h.b16 %v329
    %v516 = vunpack.c.l.b16 %v330
    %v517 = vunpack.c.h.b16 %v330
    %v518 = vunpack.c.l.b16 %v331
    %v519 = vunpack.c.h.b16 %v331
    %v520 = vunpack.c.l.b16 %v332
    %v521 = vunpack.c.h.b16 %v332
    %v522 = vunpack.c.l.b16 %v333
    %v523 = vunpack.c.h.b16 %v333
    %v524 = vunpack.c.l.b16 %v334
    %v525 = vunpack.c.h.b16 %v334
    %v526 = vunpack.c.l.b16 %v335
    %v527 = vunpack.c.h.b16 %v335
    %v528 = vunpack.c.l.b16 %v336
    %v529 = vunpack.c.h.b16 %v336
    %v530 = vunpack.c.l.b16 %v337
    %v531 = vunpack.c.h.b16 %v337
    %v532 = vunpack.c.l.b16 %v338
    %v533 = vunpack.c.h.b16 %v338
    %v534 = vunpack.c.l.b16 %v339
    %v535 = vunpack.c.h.b16 %v339
    %v536 = vunpack.c.l.b16 %v340
    %v537 = vunpack.c.h.b16 %v340
    %v538 = vunpack.c.l.b16 %v341
    %v539 = vunpack.c.h.b16 %v341
    %v540 = vunpack.c.l.b16 %v342
    %v541 = vunpack.c.h.b16 %v342
    %v542 = vunpack.c.l.b16 %v343
    %v543 = vunpack.c.h.b16 %v343
    %v544 = vunpack.c.l.b16 %v344
    %v545 = vunpack.c.h.b16 %v344
    %v546 = vunpack.c.l.b16 %v345
    %v547 = vunpack.c.h.b16 %v345
    %v548 = vunpack.c.l.b16 %v346
    %v549 = vunpack.c.h.b16 %v346
    %v550 = vunpack.c.l.b16 %v347
    %v551 = vunpack.c.h.b16 %v347
    %v552 = vunpack.c.l.b16 %v348
    %v553 = vunpack.c.h.b16 %v348
    %v554 = vunpack.c.l.b16 %v349
    %v555 = vunpack.c.h.b16 %v349
    %v556 = vunpack.c.l.b16 %v350
    %v557 = vunpack.c.h.b16 %v350
    %v558 = vunpack.c.l.b16 %v351
    %v559 = vunpack.c.h.b16 %v351
    %v560 = vunpack.c.l.b16 %v352
    %v561 = vunpack.c.h.b16 %v352
    %v562 = vunpack.c.l.b16 %v353
    %v563 = vunpack.c.h.b16 %v353
    %v564 = vunpack.c.l.b16 %v354
    %v565 = vunpack.c.h.b16 %v354
    %v566 = vunpack.c.l.b16 %v355
    %v567 = vunpack.c.h.b16 %v355
    %v568 = vunpack.c.l.b16 %v356
    %v569 = vunpack.c.h.b16 %v356
    %v570 = vunpack.c.l.b16 %v357
    %v571 = vunpack.c.h.b16 %v357
    %v572 = vpack.c.b16 %v448, %v444
    %v573 = vpack.c.b16 %v449, %v445
    %v574 = vpack.c.b16 %v450, %v446
    %v575 = vpack.c.b16 %v451, %v447
    %v576 = vpack.c.b16 %v456, %v452
    %v577 = vpack.c.b16 %v457, %v453
    %v578 = vpack.c.b16 %v458, %v454
    %v579 = vpack.c.b16 %v459, %v455
    %v580 = vpack.c.b16 %v464, %v460
    %v581 = vpack.c.b16 %v465, %v461
    %v582 = vpack.c.b16 %v466, %v462
    %v583 = vpack.c.b16 %v467, %v463
    %v584 = vpack.c.b16 %v472, %v468
    %v585 = vpack.c.b16 %v473, %v469
    %v586 = vpack.c.b16 %v474, %v470
    %v587 = vpack.c.b16 %v475, %v471
    %v588 = vpack.c.b16 %v480, %v476
    %v589 = vpack.c.b16 %v481, %v477
    %v590 = vpack.c.b16 %v482, %v478
    %v591 = vpack.c.b16 %v483, %v479
    %v592 = vpack.c.b16 %v488, %v484
    %v593 = vpack.c.b16 %v489, %v485
    %v594 = vpack.c.b16 %v490, %v486
    %v595 = vpack.c.b16 %v491, %v487
    %v596 = vpack.c.b16 %v496, %v492
    %v597 = vpack.c.b16 %v497, %v493
    %v598 = vpack.c.b16 %v498, %v494
    %v599 = vpack.c.b16 %v499, %v495
    %v600 = vpack.c.b16 %v504, %v500
    %v601 = vpack.c.b16 %v505, %v501
    %v602 = vpack.c.b16 %v506, %v502
    %v603 = vpack.c.b16 %v507, %v503
    %v604 = vpack.c.b16 %v512, %v508
    %v605 = vpack.c.b16 %v513, %v509
    %v606 = vpack.c.b16 %v514, %v510
    %v607 = vpack.c.b16 %v515, %v511
    %v608 = vpack.c.b16 %v520, %v516
    %v609 = vpack.c.b16 %v521, %v517
    %v610 = vpack.c.b16 %v522, %v518
    %v611 = vpack.c.b16 %v523, %v519
    %v612 = vpack.c.b16 %v528, %v524
    %v613 = vpack.c.b16 %v529, %v525
    %v614 = vpack.c.b16 %v530, %v526
    %v615 = vpack.c.b16 %v531, %v527
    %v616 = vpack.c.b16 %v536, %v532
    %v617 = vpack.c.b16 %v537, %v533
    %v618 = vpack.c.b16 %v538, %v534
    %v619 = vpack.c.b16 %v539, %v535
    %v620 = vpack.c.b16 %v544, %v540
    %v621 = vpack.c.b16 %v545, %v541
    %v622 = vpack.c.b16 %v546, %v542
    %v623 = vpack.c.b16 %v547, %v543
    %v624 = vpack.c.b16 %v552, %v548
    %v625 = vpack.c.b16 %v553, %v549
    %v626 = vpack.c.b16 %v554, %v550
    %v627 = vpack.c.b16 %v555, %v551
    %v628 = vpack.c.b16 %v560, %v556
    %v629 = vpack.c.b16 %v561, %v557
    %v630 = vpack.c.b16 %v562, %v558
    %v631 = vpack.c.b16 %v563, %v559
    %v632 = vpack.c.b16 %v568, %v564
    %v633 = vpack.c.b16 %v569, %v565
    %v634 = vpack.c.b16 %v570, %v566
    %v635 = vpack.c.b16 %v571, %v567
    %700 = vmatprep.subr.bf16.mxu0 %v601
    %701 = vmatpush1.bf16.msra.mxu0 %v600
    %702 = vmatprep.subr.bf16.mxu0 %v597
    %703 = vmatpush1.bf16.msra.mxu0 %v596
    %704 = vmatprep.subr.bf16.mxu0 %v593
    %705 = vmatpush1.bf16.msra.mxu0 %v592
    %706 = vmatprep.subr.bf16.mxu0 %v589
    %707 = vmatpush1.bf16.msra.mxu0 %v588
    %708 = vmatprep.subr.bf16.mxu0 %v585
    %709 = vmatpush1.bf16.msra.mxu0 %v584
    %710 = vmatprep.subr.bf16.mxu0 %v581
    %711 = vmatpush1.bf16.msra.mxu0 %v580
    %712 = vmatprep.subr.bf16.mxu0 %v577
    %713 = vmatpush1.bf16.msra.mxu0 %v576
    %714 = vmatprep.subr.bf16.mxu0 %v573
    %715 = vmatpush1.bf16.msra.mxu0 %v572
    %716 = vmatprep.subr.bf16.mxu0 %v633
    %717 = vmatpush2.bf16.msra.mxu0 %v632
    %718 = vmatprep.subr.bf16.mxu0 %v629
    %719 = vmatpush2.bf16.msra.mxu0 %v628
    %720 = vmatprep.subr.bf16.mxu0 %v625
    %721 = vmatpush2.bf16.msra.mxu0 %v624
    %722 = vmatprep.subr.bf16.mxu0 %v621
    %723 = vmatpush2.bf16.msra.mxu0 %v620
    %724 = vmatprep.subr.bf16.mxu0 %v617
    %725 = vmatpush2.bf16.msra.mxu0 %v616
    %726 = vmatprep.subr.bf16.mxu0 %v613
    %727 = vmatpush2.bf16.msra.mxu0 %v612
    %728 = vmatprep.subr.bf16.mxu0 %v609
    %729 = vmatpush2.bf16.msra.mxu0 %v608
    %730 = vmatprep.subr.bf16.mxu0 %v605
    %731 = vmatpush2.bf16.msra.mxu0 %v604
    %732 = vmatprep.mubr.bf16.mxu0 %v293
    %733 = vmatmul.mubr.bf16.gmra.mxu0 %v292
    %v734 = vpop.f32.mrf.mxu0
    %v735 = vadd.f32 %v363, %v734
    %v736 = vpop.f32.mrf.mxu0
    %v737 = vadd.f32 %v367, %v736
    %v738 = vpop.f32.mrf.mxu0
    %v739 = vpop.f32.mrf.mxu0
    %740 = vdwg.mxu0
    %741 = vmatprep.subr.bf16.mxu0 %v603
    %742 = vmatpush1.bf16.msra.mxu0 %v602
    %743 = vmatprep.subr.bf16.mxu0 %v599
    %744 = vmatpush1.bf16.msra.mxu0 %v598
    %745 = vmatprep.subr.bf16.mxu0 %v595
    %746 = vmatpush1.bf16.msra.mxu0 %v594
    %747 = vmatprep.subr.bf16.mxu0 %v591
    %748 = vmatpush1.bf16.msra.mxu0 %v590
    %749 = vmatprep.subr.bf16.mxu0 %v587
    %750 = vmatpush1.bf16.msra.mxu0 %v586
    %751 = vmatprep.subr.bf16.mxu0 %v583
    %752 = vmatpush1.bf16.msra.mxu0 %v582
    %753 = vmatprep.subr.bf16.mxu0 %v579
    %754 = vmatpush1.bf16.msra.mxu0 %v578
    %755 = vmatprep.subr.bf16.mxu0 %v575
    %756 = vmatpush1.bf16.msra.mxu0 %v574
    %757 = vmatprep.subr.bf16.mxu0 %v635
    %758 = vmatpush2.bf16.msra.mxu0 %v634
    %759 = vmatprep.subr.bf16.mxu0 %v631
    %760 = vmatpush2.bf16.msra.mxu0 %v630
    %761 = vmatprep.subr.bf16.mxu0 %v627
    %762 = vmatpush2.bf16.msra.mxu0 %v626
    %763 = vmatprep.subr.bf16.mxu0 %v623
    %764 = vmatpush2.bf16.msra.mxu0 %v622
    %765 = vmatprep.subr.bf16.mxu0 %v619
    %766 = vmatpush2.bf16.msra.mxu0 %v618
    %767 = vmatprep.subr.bf16.mxu0 %v615
    %768 = vmatpush2.bf16.msra.mxu0 %v614
    %769 = vmatprep.subr.bf16.mxu0 %v611
    %770 = vmatpush2.bf16.msra.mxu0 %v610
    %771 = vmatprep.subr.bf16.mxu0 %v607
    %772 = vmatpush2.bf16.msra.mxu0 %v606
    %773 = vmatprep.mubr.bf16.mxu0 %v293
    %774 = vmatmul.mubr.bf16.gmra.mxu0 %v292
    %v775 = vpop.f32.mrf.mxu0
    %v776 = vadd.f32 %v371, %v775
    %v777 = vpop.f32.mrf.mxu0
    %v778 = vadd.f32 %v375, %v777
    %v779 = vpop.f32.mrf.mxu0
    %v780 = vpop.f32.mrf.mxu0
    %781 = vdwg.mxu0
    %v782 = vmax.f32 %v735, 0.0
    %v783 = vmax.f32 %v737, 0.0
    %v784 = vmax.f32 %v776, 0.0
    %v785 = vmax.f32 %v778, 0.0
    %v786 = vpack.c.bf16 %v782, %v782
    %v787 = vpack.c.bf16 %v783, %v783
    %v788 = vpack.c.bf16 %v784, %v784
    %v789 = vpack.c.bf16 %v785, %v785
    %v790 = vld [vmem:[#allocation9] sm:$0xff]
    %v791 = vld [vmem:[#allocation9 + $0x8] sm:$0xff]
    %v792 = vld [vmem:[#allocation9 + $0x10] sm:$0xff]
    %v793 = vld [vmem:[#allocation9 + $0x18] sm:$0xff]
    %v794 = vld [vmem:[#allocation9 + $0x20] sm:$0xff]
    %v795 = vld [vmem:[#allocation9 + $0x28] sm:$0xff]
    %v796 = vld [vmem:[#allocation9 + $0x30] sm:$0xff]
    %v797 = vld [vmem:[#allocation9 + $0x38] sm:$0xff]
    %v798 = vld [vmem:[#allocation9 + $0x40] sm:$0xff]
    %v799 = vld [vmem:[#allocation9 + $0x48] sm:$0xff]
    %v800 = vld [vmem:[#allocation9 + $0x50] sm:$0xff]
    %v801 = vld [vmem:[#allocation9 + $0x58] sm:$0xff]
    %v802 = vld [vmem:[#allocation9 + $0x60] sm:$0xff]
    %v803 = vld [vmem:[#allocation9 + $0x68] sm:$0xff]
    %v804 = vld [vmem:[#allocation9 + $0x70] sm:$0xff]
    %v805 = vld [vmem:[#allocation9 + $0x78] sm:$0xff]
    %v806 = vld [vmem:[#allocation9 + $0x80] sm:$0xff]
    %v807 = vld [vmem:[#allocation9 + $0x88] sm:$0xff]
    %v808 = vld [vmem:[#allocation9 + $0x90] sm:$0xff]
    %v809 = vld [vmem:[#allocation9 + $0x98] sm:$0xff]
    %v810 = vld [vmem:[#allocation9 + $0xa0] sm:$0xff]
    %v811 = vld [vmem:[#allocation9 + $0xa8] sm:$0xff]
    %v812 = vld [vmem:[#allocation9 + $0xb0] sm:$0xff]
    %v813 = vld [vmem:[#allocation9 + $0xb8] sm:$0xff]
    %v814 = vld [vmem:[#allocation9 + $0xc0] sm:$0xff]
    %v815 = vld [vmem:[#allocation9 + $0xc8] sm:$0xff]
    %v816 = vld [vmem:[#allocation9 + $0xd0] sm:$0xff]
    %v817 = vld [vmem:[#allocation9 + $0xd8] sm:$0xff]
    %v818 = vld [vmem:[#allocation9 + $0xe0] sm:$0xff]
    %v819 = vld [vmem:[#allocation9 + $0xe8] sm:$0xff]
    %v820 = vld [vmem:[#allocation9 + $0xf0] sm:$0xff]
    %v821 = vld [vmem:[#allocation9 + $0xf8] sm:$0xff]
    %v822 = vld [vmem:[#allocation9 + $0x100] sm:$0xff]
    %v823 = vld [vmem:[#allocation9 + $0x108] sm:$0xff]
    %v824 = vld [vmem:[#allocation9 + $0x110] sm:$0xff]
    %v825 = vld [vmem:[#allocation9 + $0x118] sm:$0xff]
    %v826 = vld [vmem:[#allocation9 + $0x120] sm:$0xff]
    %v827 = vld [vmem:[#allocation9 + $0x128] sm:$0xff]
    %v828 = vld [vmem:[#allocation9 + $0x130] sm:$0xff]
    %v829 = vld [vmem:[#allocation9 + $0x138] sm:$0xff]
    %v830 = vld [vmem:[#allocation9 + $0x140] sm:$0xff]
    %v831 = vld [vmem:[#allocation9 + $0x148] sm:$0xff]
    %v832 = vld [vmem:[#allocation9 + $0x150] sm:$0xff]
    %v833 = vld [vmem:[#allocation9 + $0x158] sm:$0xff]
    %v834 = vld [vmem:[#allocation9 + $0x160] sm:$0xff]
    %v835 = vld [vmem:[#allocation9 + $0x168] sm:$0xff]
    %v836 = vld [vmem:[#allocation9 + $0x170] sm:$0xff]
    %v837 = vld [vmem:[#allocation9 + $0x178] sm:$0xff]
    %v838 = vld [vmem:[#allocation9 + $0x180] sm:$0xff]
    %v839 = vld [vmem:[#allocation9 + $0x188] sm:$0xff]
    %v840 = vld [vmem:[#allocation9 + $0x190] sm:$0xff]
    %v841 = vld [vmem:[#allocation9 + $0x198] sm:$0xff]
    %v842 = vld [vmem:[#allocation9 + $0x1a0] sm:$0xff]
    %v843 = vld [vmem:[#allocation9 + $0x1a8] sm:$0xff]
    %v844 = vld [vmem:[#allocation9 + $0x1b0] sm:$0xff]
    %v845 = vld [vmem:[#allocation9 + $0x1b8] sm:$0xff]
    %v846 = vld [vmem:[#allocation9 + $0x1c0] sm:$0xff]
    %v847 = vld [vmem:[#allocation9 + $0x1c8] sm:$0xff]
    %v848 = vld [vmem:[#allocation9 + $0x1d0] sm:$0xff]
    %v849 = vld [vmem:[#allocation9 + $0x1d8] sm:$0xff]
    %v850 = vld [vmem:[#allocation9 + $0x1e0] sm:$0xff]
    %v851 = vld [vmem:[#allocation9 + $0x1e8] sm:$0xff]
    %v852 = vld [vmem:[#allocation9 + $0x1f0] sm:$0xff]
    %v853 = vld [vmem:[#allocation9 + $0x1f8] sm:$0xff]
    %v854 = vld [vmem:[%s6] sm:$0x3]
    %v856 = vlaneseq
    %v857 = vshrl.u32 %v856, 7
    %v858 = vsub.s32 0, %v857
    %v859 = vrot.slane %v854, %v858
    %v860 = vlaneseq
    %v861 = vshrl.u32 %v860, 7
    %v862 = vsub.s32 1, %v861
    %v863 = vrot.slane %v854, %v862
    %v930 = vunpack.c.l.b16 %v790
    %v931 = vunpack.c.h.b16 %v790
    %v932 = vunpack.c.l.b16 %v791
    %v933 = vunpack.c.h.b16 %v791
    %v934 = vunpack.c.l.b16 %v792
    %v935 = vunpack.c.h.b16 %v792
    %v936 = vunpack.c.l.b16 %v793
    %v937 = vunpack.c.h.b16 %v793
    %v938 = vunpack.c.l.b16 %v794
    %v939 = vunpack.c.h.b16 %v794
    %v940 = vunpack.c.l.b16 %v795
    %v941 = vunpack.c.h.b16 %v795
    %v942 = vunpack.c.l.b16 %v796
    %v943 = vunpack.c.h.b16 %v796
    %v944 = vunpack.c.l.b16 %v797
    %v945 = vunpack.c.h.b16 %v797
    %v946 = vunpack.c.l.b16 %v798
    %v947 = vunpack.c.h.b16 %v798
    %v948 = vunpack.c.l.b16 %v799
    %v949 = vunpack.c.h.b16 %v799
    %v950 = vunpack.c.l.b16 %v800
    %v951 = vunpack.c.h.b16 %v800
    %v952 = vunpack.c.l.b16 %v801
    %v953 = vunpack.c.h.b16 %v801
    %v954 = vunpack.c.l.b16 %v802
    %v955 = vunpack.c.h.b16 %v802
    %v956 = vunpack.c.l.b16 %v803
    %v957 = vunpack.c.h.b16 %v803
    %v958 = vunpack.c.l.b16 %v804
    %v959 = vunpack.c.h.b16 %v804
    %v960 = vunpack.c.l.b16 %v805
    %v961 = vunpack.c.h.b16 %v805
    %v962 = vunpack.c.l.b16 %v806
    %v963 = vunpack.c.h.b16 %v806
    %v964 = vunpack.c.l.b16 %v807
    %v965 = vunpack.c.h.b16 %v807
    %v966 = vunpack.c.l.b16 %v808
    %v967 = vunpack.c.h.b16 %v808
    %v968 = vunpack.c.l.b16 %v809
    %v969 = vunpack.c.h.b16 %v809
    %v970 = vunpack.c.l.b16 %v810
    %v971 = vunpack.c.h.b16 %v810
    %v972 = vunpack.c.l.b16 %v811
    %v973 = vunpack.c.h.b16 %v811
    %v974 = vunpack.c.l.b16 %v812
    %v975 = vunpack.c.h.b16 %v812
    %v976 = vunpack.c.l.b16 %v813
    %v977 = vunpack.c.h.b16 %v813
    %v978 = vunpack.c.l.b16 %v814
    %v979 = vunpack.c.h.b16 %v814
    %v980 = vunpack.c.l.b16 %v815
    %v981 = vunpack.c.h.b16 %v815
    %v982 = vunpack.c.l.b16 %v816
    %v983 = vunpack.c.h.b16 %v816
    %v984 = vunpack.c.l.b16 %v817
    %v985 = vunpack.c.h.b16 %v817
    %v986 = vunpack.c.l.b16 %v818
    %v987 = vunpack.c.h.b16 %v818
    %v988 = vunpack.c.l.b16 %v819
    %v989 = vunpack.c.h.b16 %v819
    %v990 = vunpack.c.l.b16 %v820
    %v991 = vunpack.c.h.b16 %v820
    %v992 = vunpack.c.l.b16 %v821
    %v993 = vunpack.c.h.b16 %v821
    %v994 = vunpack.c.l.b16 %v822
    %v995 = vunpack.c.h.b16 %v822
    %v996 = vunpack.c.l.b16 %v823
    %v997 = vunpack.c.h.b16 %v823
    %v998 = vunpack.c.l.b16 %v824
    %v999 = vunpack.c.h.b16 %v824
    %v1000 = vunpack.c.l.b16 %v825
    %v1001 = vunpack.c.h.b16 %v825
    %v1002 = vunpack.c.l.b16 %v826
    %v1003 = vunpack.c.h.b16 %v826
    %v1004 = vunpack.c.l.b16 %v827
    %v1005 = vunpack.c.h.b16 %v827
    %v1006 = vunpack.c.l.b16 %v828
    %v1007 = vunpack.c.h.b16 %v828
    %v1008 = vunpack.c.l.b16 %v829
    %v1009 = vunpack.c.h.b16 %v829
    %v1010 = vunpack.c.l.b16 %v830
    %v1011 = vunpack.c.h.b16 %v830
    %v1012 = vunpack.c.l.b16 %v831
    %v1013 = vunpack.c.h.b16 %v831
    %v1014 = vunpack.c.l.b16 %v832
    %v1015 = vunpack.c.h.b16 %v832
    %v1016 = vunpack.c.l.b16 %v833
    %v1017 = vunpack.c.h.b16 %v833
    %v1018 = vunpack.c.l.b16 %v834
    %v1019 = vunpack.c.h.b16 %v834
    %v1020 = vunpack.c.l.b16 %v835
    %v1021 = vunpack.c.h.b16 %v835
    %v1022 = vunpack.c.l.b16 %v836
    %v1023 = vunpack.c.h.b16 %v836
    %v1024 = vunpack.c.l.b16 %v837
    %v1025 = vunpack.c.h.b16 %v837
    %v1026 = vunpack.c.l.b16 %v838
    %v1027 = vunpack.c.h.b16 %v838
    %v1028 = vunpack.c.l.b16 %v839
    %v1029 = vunpack.c.h.b16 %v839
    %v1030 = vunpack.c.l.b16 %v840
    %v1031 = vunpack.c.h.b16 %v840
    %v1032 = vunpack.c.l.b16 %v841
    %v1033 = vunpack.c.h.b16 %v841
    %v1034 = vunpack.c.l.b16 %v842
    %v1035 = vunpack.c.h.b16 %v842
    %v1036 = vunpack.c.l.b16 %v843
    %v1037 = vunpack.c.h.b16 %v843
    %v1038 = vunpack.c.l.b16 %v844
    %v1039 = vunpack.c.h.b16 %v844
    %v1040 = vunpack.c.l.b16 %v845
    %v1041 = vunpack.c.h.b16 %v845
    %v1042 = vunpack.c.l.b16 %v846
    %v1043 = vunpack.c.h.b16 %v846
    %v1044 = vunpack.c.l.b16 %v847
    %v1045 = vunpack.c.h.b16 %v847
    %v1046 = vunpack.c.l.b16 %v848
    %v1047 = vunpack.c.h.b16 %v848
    %v1048 = vunpack.c.l.b16 %v849
    %v1049 = vunpack.c.h.b16 %v849
    %v1050 = vunpack.c.l.b16 %v850
    %v1051 = vunpack.c.h.b16 %v850
    %v1052 = vunpack.c.l.b16 %v851
    %v1053 = vunpack.c.h.b16 %v851
    %v1054 = vunpack.c.l.b16 %v852
    %v1055 = vunpack.c.h.b16 %v852
    %v1056 = vunpack.c.l.b16 %v853
    %v1057 = vunpack.c.h.b16 %v853
    %v1058 = vpack.c.b16 %v932, %v930
    %v1059 = vpack.c.b16 %v933, %v931
    %v1060 = vpack.c.b16 %v936, %v934
    %v1061 = vpack.c.b16 %v937, %v935
    %v1062 = vpack.c.b16 %v940, %v938
    %v1063 = vpack.c.b16 %v941, %v939
    %v1064 = vpack.c.b16 %v944, %v942
    %v1065 = vpack.c.b16 %v945, %v943
    %v1066 = vpack.c.b16 %v948, %v946
    %v1067 = vpack.c.b16 %v949, %v947
    %v1068 = vpack.c.b16 %v952, %v950
    %v1069 = vpack.c.b16 %v953, %v951
    %v1070 = vpack.c.b16 %v956, %v954
    %v1071 = vpack.c.b16 %v957, %v955
    %v1072 = vpack.c.b16 %v960, %v958
    %v1073 = vpack.c.b16 %v961, %v959
    %v1074 = vpack.c.b16 %v964, %v962
    %v1075 = vpack.c.b16 %v965, %v963
    %v1076 = vpack.c.b16 %v968, %v966
    %v1077 = vpack.c.b16 %v969, %v967
    %v1078 = vpack.c.b16 %v972, %v970
    %v1079 = vpack.c.b16 %v973, %v971
    %v1080 = vpack.c.b16 %v976, %v974
    %v1081 = vpack.c.b16 %v977, %v975
    %v1082 = vpack.c.b16 %v980, %v978
    %v1083 = vpack.c.b16 %v981, %v979
    %v1084 = vpack.c.b16 %v984, %v982
    %v1085 = vpack.c.b16 %v985, %v983
    %v1086 = vpack.c.b16 %v988, %v986
    %v1087 = vpack.c.b16 %v989, %v987
    %v1088 = vpack.c.b16 %v992, %v990
    %v1089 = vpack.c.b16 %v993, %v991
    %v1090 = vpack.c.b16 %v996, %v994
    %v1091 = vpack.c.b16 %v997, %v995
    %v1092 = vpack.c.b16 %v1000, %v998
    %v1093 = vpack.c.b16 %v1001, %v999
    %v1094 = vpack.c.b16 %v1004, %v1002
    %v1095 = vpack.c.b16 %v1005, %v1003
    %v1096 = vpack.c.b16 %v1008, %v1006
    %v1097 = vpack.c.b16 %v1009, %v1007
    %v1098 = vpack.c.b16 %v1012, %v1010
    %v1099 = vpack.c.b16 %v1013, %v1011
    %v1100 = vpack.c.b16 %v1016, %v1014
    %v1101 = vpack.c.b16 %v1017, %v1015
    %v1102 = vpack.c.b16 %v1020, %v1018
    %v1103 = vpack.c.b16 %v1021, %v1019
    %v1104 = vpack.c.b16 %v1024, %v1022
    %v1105 = vpack.c.b16 %v1025, %v1023
    %v1106 = vpack.c.b16 %v1028, %v1026
    %v1107 = vpack.c.b16 %v1029, %v1027
    %v1108 = vpack.c.b16 %v1032, %v1030
    %v1109 = vpack.c.b16 %v1033, %v1031
    %v1110 = vpack.c.b16 %v1036, %v1034
    %v1111 = vpack.c.b16 %v1037, %v1035
    %v1112 = vpack.c.b16 %v1040, %v1038
    %v1113 = vpack.c.b16 %v1041, %v1039
    %v1114 = vpack.c.b16 %v1044, %v1042
    %v1115 = vpack.c.b16 %v1045, %v1043
    %v1116 = vpack.c.b16 %v1048, %v1046
    %v1117 = vpack.c.b16 %v1049, %v1047
    %v1118 = vpack.c.b16 %v1052, %v1050
    %v1119 = vpack.c.b16 %v1053, %v1051
    %v1120 = vpack.c.b16 %v1056, %v1054
    %v1121 = vpack.c.b16 %v1057, %v1055
    %1186 = vmatprep.subr.bf16.mxu0 %v1073
    %1187 = vmatpush1.bf16.msra.mxu0 %v1072
    %1188 = vmatprep.subr.bf16.mxu0 %v1071
    %1189 = vmatpush1.bf16.msra.mxu0 %v1070
    %1190 = vmatprep.subr.bf16.mxu0 %v1069
    %1191 = vmatpush1.bf16.msra.mxu0 %v1068
    %1192 = vmatprep.subr.bf16.mxu0 %v1067
    %1193 = vmatpush1.bf16.msra.mxu0 %v1066
    %1194 = vmatprep.subr.bf16.mxu0 %v1065
    %1195 = vmatpush1.bf16.msra.mxu0 %v1064
    %1196 = vmatprep.subr.bf16.mxu0 %v1063
    %1197 = vmatpush1.bf16.msra.mxu0 %v1062
    %1198 = vmatprep.subr.bf16.mxu0 %v1061
    %1199 = vmatpush1.bf16.msra.mxu0 %v1060
    %1200 = vmatprep.subr.bf16.mxu0 %v1059
    %1201 = vmatpush1.bf16.msra.mxu0 %v1058
    %1202 = vmatprep.subr.bf16.mxu0 %v1089
    %1203 = vmatpush2.bf16.msra.mxu0 %v1088
    %1204 = vmatprep.subr.bf16.mxu0 %v1087
    %1205 = vmatpush2.bf16.msra.mxu0 %v1086
    %1206 = vmatprep.subr.bf16.mxu0 %v1085
    %1207 = vmatpush2.bf16.msra.mxu0 %v1084
    %1208 = vmatprep.subr.bf16.mxu0 %v1083
    %1209 = vmatpush2.bf16.msra.mxu0 %v1082
    %1210 = vmatprep.subr.bf16.mxu0 %v1081
    %1211 = vmatpush2.bf16.msra.mxu0 %v1080
    %1212 = vmatprep.subr.bf16.mxu0 %v1079
    %1213 = vmatpush2.bf16.msra.mxu0 %v1078
    %1214 = vmatprep.subr.bf16.mxu0 %v1077
    %1215 = vmatpush2.bf16.msra.mxu0 %v1076
    %1216 = vmatprep.subr.bf16.mxu0 %v1075
    %1217 = vmatpush2.bf16.msra.mxu0 %v1074
    %1218 = vmatprep.mubr.bf16.mxu0 %v787
    %1219 = vmatmul.mubr.bf16.gmra.mxu0 %v786
    %v1220 = vpop.f32.mrf.mxu0
    %v1221 = vadd.f32 %v859, %v1220
    %v1222 = vpop.f32.mrf.mxu0
    %v1223 = vadd.f32 %v863, %v1222
    %v1224 = vpop.f32.mrf.mxu0
    %v1225 = vpop.f32.mrf.mxu0
    %1226 = vdwg.mxu0
    %1227 = vmatprep.subr.bf16.mxu0 %v1105
    %1228 = vmatpush1.bf16.msra.mxu0 %v1104
    %1229 = vmatprep.subr.bf16.mxu0 %v1103
    %1230 = vmatpush1.bf16.msra.mxu0 %v1102
    %1231 = vmatprep.subr.bf16.mxu0 %v1101
    %1232 = vmatpush1.bf16.msra.mxu0 %v1100
    %1233 = vmatprep.subr.bf16.mxu0 %v1099
    %1234 = vmatpush1.bf16.msra.mxu0 %v1098
    %1235 = vmatprep.subr.bf16.mxu0 %v1097
    %1236 = vmatpush1.bf16.msra.mxu0 %v1096
    %1237 = vmatprep.subr.bf16.mxu0 %v1095
    %1238 = vmatpush1.bf16.msra.mxu0 %v1094
    %1239 = vmatprep.subr.bf16.mxu0 %v1093
    %1240 = vmatpush1.bf16.msra.mxu0 %v1092
    %1241 = vmatprep.subr.bf16.mxu0 %v1091
    %1242 = vmatpush1.bf16.msra.mxu0 %v1090
    %1243 = vmatprep.subr.bf16.mxu0 %v1121
    %1244 = vmatpush2.bf16.msra.mxu0 %v1120
    %1245 = vmatprep.subr.bf16.mxu0 %v1119
    %1246 = vmatpush2.bf16.msra.mxu0 %v1118
    %1247 = vmatprep.subr.bf16.mxu0 %v1117
    %1248 = vmatpush2.bf16.msra.mxu0 %v1116
    %1249 = vmatprep.subr.bf16.mxu0 %v1115
    %1250 = vmatpush2.bf16.msra.mxu0 %v1114
    %1251 = vmatprep.subr.bf16.mxu0 %v1113
    %1252 = vmatpush2.bf16.msra.mxu0 %v1112
    %1253 = vmatprep.subr.bf16.mxu0 %v1111
    %1254 = vmatpush2.bf16.msra.mxu0 %v1110
    %1255 = vmatprep.subr.bf16.mxu0 %v1109
    %1256 = vmatpush2.bf16.msra.mxu0 %v1108
    %1257 = vmatprep.subr.bf16.mxu0 %v1107
    %1258 = vmatpush2.bf16.msra.mxu0 %v1106
    %1259 = vmatprep.mubr.bf16.mxu0 %v789
    %1260 = vmatmul.mubr.bf16.gmra.mxu0 %v788
    %v1261 = vpop.f32.mrf.mxu0
    %v1262 = vadd.f32 %v1221, %v1261
    %v1263 = vpop.f32.mrf.mxu0
    %v1264 = vadd.f32 %v1223, %v1263
    %v1265 = vpop.f32.mrf.mxu0
    %v1266 = vpop.f32.mrf.mxu0
    %1267 = vdwg.mxu0
    %v1268 = vmax.f32 %v1262, 0.0
    %v1269 = vmax.f32 %v1264, 0.0
    %v1270 = vld [vmem:[%s7] sm:$0x3]
    %v1271 = vld [vmem:[#allocation2] sm:$0x1]
    %1273 = vset.pattern.permute.xlu0 0
    %1274 = vperm.xlu0 %1273, %v1271
    %v1275 = vpop.permute.xlu0 %1274
    %v1277 = vlaneseq
    %v1278 = vshrl.u32 %v1277, 7
    %v1279 = vsub.s32 0, %v1278
    %v1280 = vrot.slane %v1275, %v1279
    %v1282 = vlaneseq
    %v1283 = vshrl.u32 %v1282, 7
    %v1284 = vsub.s32 0, %v1283
    %v1285 = vrot.slane %v1270, %v1284
    %v1286 = vlaneseq
    %v1287 = vshrl.u32 %v1286, 7
    %v1288 = vsub.s32 1, %v1287
    %v1289 = vrot.slane %v1270, %v1288
    %1292 = vmatprep.subr.mxu0 0.0
    %1293 = vmatpush1.xpose.msra.mxu0 0.0
    %1294 = vmatprep.subr.mxu0 0.0
    %1295 = vmatpush1.xpose.msra.mxu0 0.0
    %1296 = vmatprep.subr.mxu0 0.0
    %1297 = vmatpush1.xpose.msra.mxu0 0.0
    %1298 = vmatprep.subr.mxu0 0.0
    %1299 = vmatpush1.xpose.msra.mxu0 0.0
    %1300 = vmatprep.subr.mxu0 0.0
    %1301 = vmatpush1.xpose.msra.mxu0 0.0
    %1302 = vmatprep.subr.mxu0 0.0
    %1303 = vmatpush1.xpose.msra.mxu0 0.0
    %1304 = vmatprep.subr.mxu0 0.0
    %1305 = vmatpush1.xpose.msra.mxu0 0.0
    %1306 = vmatprep.subr.mxu0 0.0
    %1307 = vmatpush1.xpose.msra.mxu0 0.0
    %1308 = vmatprep.subr.mxu0 0.0
    %1309 = vmatpush1.xpose.msra.mxu0 0.0
    %1310 = vmatprep.subr.mxu0 0.0
    %1311 = vmatpush1.xpose.msra.mxu0 0.0
    %1312 = vmatprep.subr.mxu0 0.0
    %1313 = vmatpush1.xpose.msra.mxu0 0.0
    %1314 = vmatprep.subr.mxu0 0.0
    %1315 = vmatpush1.xpose.msra.mxu0 0.0
    %1316 = vmatprep.subr.mxu0 0.0
    %1317 = vmatpush1.xpose.msra.mxu0 0.0
    %1318 = vmatprep.subr.mxu0 0.0
    %1319 = vmatpush1.xpose.msra.mxu0 0.0
    %1320 = vmatprep.subr.mxu0 0.0
    %1321 = vmatpush1.xpose.msra.mxu0 0.0
    %1322 = vmatprep.subr.mxu0 %v1269
    %1323 = vmatpush1.xpose.msra.mxu0 %v1268
    %1324 = vmatprep.subr.mxu0 0.0
    %1325 = vmatpush2.xpose.msra.mxu0 0.0
    %1326 = vmatprep.subr.mxu0 0.0
    %1327 = vmatpush2.xpose.msra.mxu0 0.0
    %1328 = vmatprep.subr.mxu0 0.0
    %1329 = vmatpush2.xpose.msra.mxu0 0.0
    %1330 = vmatprep.subr.mxu0 0.0
    %1331 = vmatpush2.xpose.msra.mxu0 0.0
    %1332 = vmatprep.subr.mxu0 0.0
    %1333 = vmatpush2.xpose.msra.mxu0 0.0
    %1334 = vmatprep.subr.mxu0 0.0
    %1335 = vmatpush2.xpose.msra.mxu0 0.0
    %1336 = vmatprep.subr.mxu0 0.0
    %1337 = vmatpush2.xpose.msra.mxu0 0.0
    %1338 = vmatprep.subr.mxu0 0.0
    %1339 = vmatpush2.xpose.msra.mxu0 0.0
    %1340 = vmatprep.subr.mxu0 0.0
    %1341 = vmatpush2.xpose.msra.mxu0 0.0
    %1342 = vmatprep.subr.mxu0 0.0
    %1343 = vmatpush2.xpose.msra.mxu0 0.0
    %1344 = vmatprep.subr.mxu0 0.0
    %1345 = vmatpush2.xpose.msra.mxu0 0.0
    %1346 = vmatprep.subr.mxu0 0.0
    %1347 = vmatpush2.xpose.msra.mxu0 0.0
    %1348 = vmatprep.subr.mxu0 0.0
    %1349 = vmatpush2.xpose.msra.mxu0 0.0
    %1350 = vmatprep.subr.mxu0 0.0
    %1351 = vmatpush2.xpose.msra.mxu0 0.0
    %1352 = vmatprep.subr.mxu0 0.0
    %1353 = vmatpush2.xpose.msra.mxu0 0.0
    %1354 = vmatprep.subr.mxu0 0.0
    %1355 = vmatpush2.xpose.msra.mxu0 0.0
    %1356 = vmatprep.mubr.f32.mxu0 %v1289
    %1357 = vmatmul.mubr.f32.gmra.mxu0 %v1285
    %v1358 = vpop.f32.mrf.mxu0
    %v1359 = vadd.f32 %v1280, %v1358
    %v1360 = vpop.f32.mrf.mxu0
    %1361 = vdwg.mxu0
    %vm1362 = vcmask 57344
    %1363 = vst.msk [vmem:[#allocation11] sm:$0x1] %vm1362, %v1359
    // Predicated region
    $region54: #{tpu_custom_call.1} parent=1 // pred_check
      _
    $region55: #{tpu_custom_call.1} parent=1 // pred_check_branch
      %1365 = sbr.rel (0) target = $region57
    $region56: #{tpu_custom_call.1} parent=1 // pred_region
      %s1367 = ssub.s32 16, 16
      %1368 = vsyncadd [#allocation5], %s1367
      %s1370 = sshll.u32 [#allocation11], 4
      %s1371 = int_to_ptr.vmem [resolvable:$true] %s1370
      %1373 = dma.vmem_to_hbm [thread:$0]  %s1371, 16, %s9, [#allocation5]
    $region57: #{tpu_custom_call.1} parent=1 // pred_fallthru
      _
    // Predicated region
    $region58: #{tpu_custom_call.1} parent=1 // pred_check
      _
    $region59: #{tpu_custom_call.1} parent=1 // pred_check_branch
      %1375 = sbr.rel (0) target = $region61
    $region60: #{tpu_custom_call.1} parent=1 // pred_region
      %1376 = dma.done [#allocation5], 16
    $region61: #{tpu_custom_call.1} parent=1 // pred_fallthru
      _
    %1377 = vsyncpa [#allocation4], 1
    %1378 = vsyncpa [#allocation7], 1
    %1379 = vsyncpa [#allocation10], 1
    %1380 = vsyncpa [#allocation5], 1

</llo_original>
